<compile_context>
chip_gen: v7x
topology: tpu7x:2x2x1
jax: 0.10.0
libtpu: 0.0.40
codegen_flags: <defaults>
</compile_context>

<pallas_src>
import functools

import jax
import jax.numpy as jnp
from jax.experimental import pallas as pl
from jax.experimental.pallas import tpu as pltpu

_LANES = 128


def _round_up(a, b):
    return pl.cdiv(a, b) * b


def _int_pow(q, k):
    """q**k for static non-negative integer k via repeated multiplication (VPU-only)."""
    out = jnp.ones_like(q)
    base = q
    while k > 0:
        if k & 1:
            out = out * base
        k >>= 1
        if k:
            base = base * base
    return out


def _focal_loss_kernel(logits_ref, target_ref, out_ref, *, gamma, n_rows, tile_n):
    i = pl.program_id(0)

    x = logits_ref[...]                                # (tile_n, C) native dtype
    t = target_ref[...]                                # (tile_n, 1) int32

    # Row-wise log-sum-exp.  max / shift stay in the input dtype (halves vreg
    # pressure for bf16 on v6e/v7x); the exp-sum accumulates in f32.
    m = jnp.max(x, axis=-1, keepdims=True)
    z = x - m
    sumexp = jnp.sum(jnp.exp(z), axis=-1, keepdims=True, dtype=jnp.float32)
    lse = jnp.log(sumexp)                              # (tile_n, 1) f32

    # Gather the (already shifted) target logit via one-hot select, so all the
    # focal math below is O(N) column work only.
    col = jax.lax.broadcasted_iota(jnp.int32, x.shape, 1)
    onehot = col == t                                  # (tile_n, C) bool
    z_t = jnp.sum(jnp.where(onehot, z, jnp.zeros_like(z)),
                  axis=-1, keepdims=True, dtype=jnp.float32)   # (tile_n, 1)

    logp_t = z_t - lse                                 # log p_target
    p_t = jnp.exp(logp_t)
    q = jnp.maximum(1.0 - p_t, 0.0)                    # clamp tiny negatives

    g = float(gamma)
    if g == 0.0:
        mod = jnp.ones_like(q)
    elif g.is_integer() and g > 0:
        mod = _int_pow(q, int(g))                      # gamma=2 -> q*q (no EUP pow)
    else:
        mod = q ** g                                   # non-integer gamma fallback

    focal_t = mod * logp_t                             # (tile_n, 1) f32

    # Mask rows past the logical batch (the ragged final tile reads junk rows;
    # jnp.where keeps any NaN/Inf there out of the sum).
    row = i * tile_n + jax.lax.broadcasted_iota(jnp.int32, (tile_n, 1), 0)
    valid = row < n_rows
    partial = jnp.sum(jnp.where(valid, focal_t, 0.0))  # per-tile scalar

    # Per-tile partial sum into this tile's own lane-dense output block.  The
    # grid axis carries no cross-step state, so it can be sharded ("parallel")
    # across both TensorCores on v7x; the reduce over tiles finishes in JAX.
    out_ref[...] = jnp.broadcast_to(
        jnp.reshape(partial, (1, 1, 1)), out_ref.shape).astype(jnp.float32)


def focal_loss(logits, targets, gamma=2.0, tile_n=4096):
    """Mean focal loss over the batch. logits: (N, C) float, targets: (N,) int."""
    n, c = logits.shape
    targets2d = targets.astype(jnp.int32).reshape(n, 1)

    itemsize = jnp.dtype(logits.dtype).itemsize
    sublane = {4: 8, 2: 16, 1: 32}.get(itemsize, 8)    # native sublane multiple

    # Size the batch tile from *lane-padded* VMEM bytes: logits row padded to a
    # multiple of 128 lanes plus the int32 target column (also 128 lanes).
    # 8 MiB per buffer keeps 2x double-buffered inputs well under the 32 MiB
    # limit requested below (safe on v7x's 64 MiB physical VMEM).
    c_pad = _round_up(c, _LANES)
    bytes_per_row = c_pad * itemsize + _LANES * 4
    budget = 8 * 1024 * 1024
    max_rows = max(sublane, (budget // bytes_per_row) // sublane * sublane)
    tile_n = int(min(tile_n, max_rows, _round_up(n, sublane)))
    tile_n = max(sublane, _round_up(tile_n, sublane))

    # No host-side padding: the ragged last tile is handled by the in-kernel
    # row mask, so the (N, C) logits are streamed from HBM exactly once.
    num_tiles = int(pl.cdiv(n, tile_n))

    kernel = functools.partial(
        _focal_loss_kernel, gamma=float(gamma), n_rows=n, tile_n=tile_n)

    partials = pl.pallas_call(
        kernel,
        out_shape=jax.ShapeDtypeStruct((num_tiles, 8, _LANES), jnp.float32),
        grid_spec=pltpu.PrefetchScalarGridSpec(
            num_scalar_prefetch=0,
            grid=(num_tiles,),
            in_specs=[
                pl.BlockSpec((tile_n, c), lambda i: (i, 0)),   # logits tile
                pl.BlockSpec((tile_n, 1), lambda i: (i, 0)),   # target tile
            ],
            out_specs=pl.BlockSpec((1, 8, _LANES), lambda i: (i, 0, 0)),
        ),
        compiler_params=pltpu.CompilerParams(
            dimension_semantics=("parallel",),         # independent batch tiles
            vmem_limit_bytes=32 * 1024 * 1024,         # headroom on v7x (64 MiB)
        ),
    )(logits, targets2d)

    # Finish the mean over the tiny per-tile partial sums in JAX.
    return -jnp.sum(partials[:, 0, 0]) / n


def _focal_loss_ref(logits, targets, gamma=2.0):
    # Pure-JAX reference mirroring the PyTorch module.
    logp = jax.nn.log_softmax(logits.astype(jnp.float32), axis=1)
    p = jnp.exp(logp)
    focal = (1.0 - p) ** gamma * logp
    picked = jnp.take_along_axis(focal, targets[:, None].astype(jnp.int32), axis=1)
    return -jnp.mean(picked)


if __name__ == "__main__":
    key = jax.random.PRNGKey(0)
    k1, k2, k3, k4 = jax.random.split(key, 4)

    # CIFAR10-style classification: batch=8, 10 classes (single tile).
    N, C = 8, 10
    logits = jax.random.normal(k1, (N, C), dtype=jnp.float32)
    targets = jax.random.randint(k2, (N,), 0, C, dtype=jnp.int32)

    loss = focal_loss(logits, targets, gamma=2.0)
    jax.block_until_ready(loss)
    ref = _focal_loss_ref(logits, targets, gamma=2.0)
    assert jnp.allclose(loss, ref, atol=1e-5, rtol=1e-5), (loss, ref)

    # Multi-tile + ragged batch (exercises the no-pad path, row masking and the
    # per-tile-partials "parallel" reduction).
    N2, C2 = 37, 10
    logits2 = jax.random.normal(k3, (N2, C2), dtype=jnp.float32)
    targets2 = jax.random.randint(k4, (N2,), 0, C2, dtype=jnp.int32)

    loss2 = focal_loss(logits2, targets2, gamma=2.0, tile_n=16)
    jax.block_until_ready(loss2)
    ref2 = _focal_loss_ref(logits2, targets2, gamma=2.0)
    assert jnp.allclose(loss2, ref2, atol=1e-5, rtol=1e-5), (loss2, ref2)

    print("KERNEL_OK")
</pallas_src>

<mosaic_0001>
module attributes {stable_mosaic.version = 11 : i64} {
  func.func @_focal_loss_kernel(%arg0: i32, %arg1: memref<8x10xf32, #tpu.memory_space<vmem>>, %arg2: memref<8x1xi32, #tpu.memory_space<vmem>>, %arg3: memref<1x8x128xf32, #tpu.memory_space<vmem>>) attributes {dimension_semantics = [#tpu.dimension_semantics<parallel>], iteration_bounds = array<i64: 1>, scalar_prefetch = 0 : i64, scratch_operands = 0 : i64, tpu.core_type = #tpu.core_type<tc>, window_params = [{transform_indices = @transform_0, window_bounds = array<i64: 8, 10>}, {transform_indices = @transform_1, window_bounds = array<i64: 8, 1>}, {transform_indices = @transform_2, window_bounds = array<i64: 1, 8, 128>}]} {
    %c0 = arith.constant 0 : index
    %c0_0 = arith.constant 0 : index
    %0 = vector.load %arg1[%c0, %c0_0] : memref<8x10xf32, #tpu.memory_space<vmem>>, vector<8x10xf32>
    %c0_1 = arith.constant 0 : index
    %c0_2 = arith.constant 0 : index
    %1 = vector.load %arg2[%c0_1, %c0_2] : memref<8x1xi32, #tpu.memory_space<vmem>>, vector<8x1xi32>
    %cst = arith.constant dense<0xFF800000> : vector<8xf32>
    %2 = vector.multi_reduction <maximumf>, %0, %cst [1] : vector<8x10xf32> to vector<8xf32>
    %3 = vector.shape_cast %2 : vector<8xf32> to vector<8x1xf32>
    %4 = vector.broadcast %3 : vector<8x1xf32> to vector<8x10xf32>
    %5 = arith.subf %0, %4 : vector<8x10xf32>
    %6 = math.exp %5 : vector<8x10xf32>
    %cst_3 = arith.constant dense<0.000000e+00> : vector<8xf32>
    %7 = vector.multi_reduction <add>, %6, %cst_3 [1] : vector<8x10xf32> to vector<8xf32>
    %8 = vector.shape_cast %7 : vector<8xf32> to vector<8x1xf32>
    %9 = math.log %8 : vector<8x1xf32>
    %10 = tpu.iota {dimensions = array<i32: 1>} : vector<8x10xi32>
    %11 = vector.broadcast %1 : vector<8x1xi32> to vector<8x10xi32>
    %12 = arith.cmpi eq, %10, %11 : vector<8x10xi32>
    %cst_4 = arith.constant 0.000000e+00 : f32
    %13 = vector.broadcast %cst_4 : f32 to vector<8x10xf32>
    %14 = arith.select %12, %5, %13 : vector<8x10xi1>, vector<8x10xf32>
    %cst_5 = arith.constant dense<0.000000e+00> : vector<8xf32>
    %15 = vector.multi_reduction <add>, %14, %cst_5 [1] : vector<8x10xf32> to vector<8xf32>
    %16 = vector.shape_cast %15 : vector<8xf32> to vector<8x1xf32>
    %17 = arith.subf %16, %9 : vector<8x1xf32>
    %18 = math.exp %17 : vector<8x1xf32>
    %cst_6 = arith.constant 1.000000e+00 : f32
    %19 = vector.broadcast %cst_6 : f32 to vector<8x1xf32>
    %20 = arith.subf %19, %18 : vector<8x1xf32>
    %cst_7 = arith.constant 0.000000e+00 : f32
    %21 = vector.broadcast %cst_7 : f32 to vector<8x1xf32>
    %22 = arith.maximumf %20, %21 : vector<8x1xf32>
    %cst_8 = arith.constant 1.000000e+00 : f32
    %23 = vector.broadcast %cst_8 : f32 to vector<8x1xf32>
    %24 = arith.mulf %22, %22 : vector<8x1xf32>
    %25 = arith.mulf %23, %24 : vector<8x1xf32>
    %26 = arith.mulf %25, %17 : vector<8x1xf32>
    %c8_i32 = arith.constant 8 : i32
    %27 = arith.muli %arg0, %c8_i32 : i32
    %28 = tpu.iota {dimensions = array<i32: 0>} : vector<8x1xi32>
    %29 = vector.broadcast %27 : i32 to vector<8x1xi32>
    %30 = arith.addi %29, %28 : vector<8x1xi32>
    %c8_i32_9 = arith.constant 8 : i32
    %31 = vector.broadcast %c8_i32_9 : i32 to vector<8x1xi32>
    %32 = arith.cmpi slt, %30, %31 : vector<8x1xi32>
    %cst_10 = arith.constant 0.000000e+00 : f32
    %33 = vector.broadcast %cst_10 : f32 to vector<8x1xf32>
    %34 = arith.select %32, %26, %33 : vector<8x1xi1>, vector<8x1xf32>
    %35 = vector.shape_cast %34 : vector<8x1xf32> to vector<1x8x1xf32>
    %cst_11 = arith.constant dense<0.000000e+00> : vector<1xf32>
    %36 = vector.multi_reduction <add>, %35, %cst_11 [1, 2] : vector<1x8x1xf32> to vector<1xf32>
    %37 = vector.shape_cast %36 : vector<1xf32> to vector<1x1x1xf32>
    %38 = vector.extract %37[0, 0, 0] : f32 from vector<1x1x1xf32>
    %39 = vector.broadcast %38 : f32 to vector<1x1x1xf32>
    %40 = vector.shape_cast %39 : vector<1x1x1xf32> to vector<1x1x1xf32>
    %41 = vector.broadcast %40 : vector<1x1x1xf32> to vector<1x8x128xf32>
    %c0_12 = arith.constant 0 : index
    %c0_13 = arith.constant 0 : index
    %c0_14 = arith.constant 0 : index
    %42 = vector.load %arg3[%c0_12, %c0_13, %c0_14] : memref<1x8x128xf32, #tpu.memory_space<vmem>>, vector<1x8x128xf32>
    tpu.vector_store %arg3[%c0_12, %c0_13, %c0_14], %41 {strides = array<i32>} : memref<1x8x128xf32, #tpu.memory_space<vmem>>, vector<1x8x128xf32>,
    return
  }
  func.func @transform_0(%arg0: i32) -> (i32, i32) {
    %c0_i32 = arith.constant 0 : i32
    %c0_i32_0 = arith.constant 0 : i32
    return %arg0, %c0_i32 : i32, i32
  }
  func.func @transform_1(%arg0: i32) -> (i32, i32) {
    %c0_i32 = arith.constant 0 : i32
    %c0_i32_0 = arith.constant 0 : i32
    return %arg0, %c0_i32 : i32, i32
  }
  func.func @transform_2(%arg0: i32) -> (i32, i32, i32) {
    %c0_i32 = arith.constant 0 : i32
    %c0_i32_0 = arith.constant 0 : i32
    %c0_i32_1 = arith.constant 0 : i32
    return %arg0, %c0_i32, %c0_i32_0 : i32, i32, i32
  }
}

</mosaic_0001>

<llo_original>
// kernel: tpu_custom_call.1
$region0: #{tpu_custom_call.1}
  #allocation0 [shape = 'u32[]', space=smem, size = 0x4, offset = 0x4, fixed_abs, tag = 'smem constant byte address 0x4 - core index']
  #allocation1 [shape = 'u32[144,128]{1,0:T(1,128)}', space=vmem, size = 0x12000, scoped, tag = 'internal scratch']
  %s0 = inlined_call_operand.vmem [shape: f32[8,10], index: 0, kind: input, shape index: {}]
  %s1 = inlined_call_operand.vmem [shape: s32[8,1], index: 1, kind: input, shape index: {}]
  %s2 = inlined_call_operand.hbm [shape: f32[1,8,128], index: 2, kind: output, shape index: {}]
  %s3 = sld [smem:[#allocation0]]
  $region18: #{tpu_custom_call.1} parent=0
    _
  %s5 = ssub.s32 1, %s3
  %s6 = scalar_select 0, %s5, %s3
  $region1: #{tpu_custom_call.1} parent=0
    #allocation2 [shape = 'u8[4096]{0}', space=vmem, size = 0x1000, scoped, tag = 'output window, operand 0, single buffered']
    #allocation3 [shape = 's32[1]{0}', space=sflag, size = 0x4, scoped, tag = 'scoped memory for tpu_custom_call.1']
    %7 = vsyncpa [#allocation3], 0
    // Predicated region
    $region2: #{tpu_custom_call.1} parent=1 // pred_check
      _
    $region3: #{tpu_custom_call.1} parent=1 // pred_check_branch
      %9 = sbr.rel (0) target = $region5
    $region4: #{tpu_custom_call.1} parent=1 // pred_region
      _
    $region5: #{tpu_custom_call.1} parent=1 // pred_fallthru
      _
    // Predicated region
    $region6: #{tpu_custom_call.1} parent=1 // pred_check
      _
    $region7: #{tpu_custom_call.1} parent=1 // pred_check_branch
      %11 = sbr.rel (0) target = $region9
    $region8: #{tpu_custom_call.1} parent=1 // pred_region
      _
    $region9: #{tpu_custom_call.1} parent=1 // pred_fallthru
      _
    %v12 = vld [vmem:[%s0] sm:$0xff]
    %v13 = vld [vmem:[%s1] sm:$0xff]
    %vm14 = vcmask 80896
    %v15 = vsel %vm14, %v12, -inf
    %16 = vmax.xlane.f32.xlu0 %v15
    %v17 = vpop.xlane.xlu0 %16
    %v18 = vsub.f32 %v12, %v17
    %v19 = vmul.f32 %v18, 1.442695
    %v20 = vpow.pop %v19
    %v21 = vsel %vm14, %v20, 0.0
    %22 = vadd.xlane.f32.xlu0 %v21
    %v23 = vpop.xlane.xlu0 %22
    %v24 = vlog2.pop %v23
    %v25 = vmul.f32 %v24, 0.6931472
    %v26 = vlaneseq
    %v27 = vand.u32 %v26, 127
    %28 = vset.pattern.permute.xlu0 0
    %29 = vperm.xlu0 %28, %v13
    %v30 = vpop.permute.xlu0 %29
    %vm31 = vcmp.eq.s32.totalorder %v27, %v30
    %v32 = vsel %vm31, %v18, 0.0
    %v33 = vsel %vm14, %v32, 0.0
    %34 = vadd.xlane.f32.xlu0 %v33
    %v35 = vpop.xlane.xlu0 %34
    %v36 = vsub.f32 %v35, %v25
    %v37 = vmul.f32 %v36, 1.442695
    %v38 = vpow.pop %v37
    %v39 = vsub.f32 1.0, %v38
    %v40 = vmax.f32 %v39, 0.0
    %v41 = vmul.f32 %v40, %v40
    %v42 = vmul.f32 %v41, %v36
    %s43 = smul.u32 0, 8
    %v44 = vlaneseq
    %v45 = vshrl.u32 %v44, 7
    %v46 = vstv %s43
    %v47 = vadd.s32 %v46, %v45
    %vm48 = vcmp.lt.s32.totalorder %v47, 8
    %v49 = vsel %vm48, %v42, 0.0
    %vm50 = vcmask 7168
    %v51 = vsel %vm50, %v49, 0.0
    %52 = vadd.xlane.f32.xlu0 %v51
    %v53 = vpop.xlane.xlu0 %52
    %v54 = vrot.slane %v53, 4
    %v55 = vadd.f32 %v53, %v54
    %v56 = vrot.slane %v55, 2
    %v57 = vadd.f32 %v55, %v56
    %v58 = vrot.slane %v57, 1
    %v59 = vadd.f32 %v57, %v58
    %s60 = vtos %v59
    %v61 = vstv %s60
    %62 = vst [vmem:[#allocation2] sm:$0xff] %v61
    // Predicated region
    $region10: #{tpu_custom_call.1} parent=1 // pred_check
      _
    $region11: #{tpu_custom_call.1} parent=1 // pred_check_branch
      %64 = sbr.rel (0) target = $region13
    $region12: #{tpu_custom_call.1} parent=1 // pred_region
      %s66 = ssub.s32 128, 128
      %67 = vsyncadd [#allocation3], %s66
      %s69 = sshll.u32 [#allocation2], 4
      %s70 = int_to_ptr.vmem [resolvable:$true] %s69
      %72 = dma.vmem_to_hbm [thread:$0]  %s70, 128, %s2, [#allocation3]
    $region13: #{tpu_custom_call.1} parent=1 // pred_fallthru
      _
    // Predicated region
    $region14: #{tpu_custom_call.1} parent=1 // pred_check
      _
    $region15: #{tpu_custom_call.1} parent=1 // pred_check_branch
      %74 = sbr.rel (0) target = $region17
    $region16: #{tpu_custom_call.1} parent=1 // pred_region
      %75 = dma.done [#allocation3], 128
    $region17: #{tpu_custom_call.1} parent=1 // pred_fallthru
      _
    %76 = vsyncpa [#allocation3], 1

</llo_original>
